<compile_context>
chip_gen: v5e
topology: v5e:2x2
jax: 0.10.0
libtpu: 0.0.40
codegen_flags: <defaults>
</compile_context>

<pallas_src>
import jax
import jax.numpy as jnp
from jax.experimental import pallas as pl
from jax.experimental.pallas import tpu as pltpu


def pointwise_kernel(x_ref, w1_ref, b1_ref, w2_ref, b2_ref, w3_ref, b3_ref,
                     o_ref):
    """One (Cin, tile_hw) spatial tile -> (Cout, tile_hw), channel-first.

    Three 1x1 convs == three channel matmuls, each followed by
    LeakyReLU(negative_slope=0.01).  All math in f32.
    """
    def leaky_relu(v):
        return jnp.where(v > 0, v, 0.01 * v)

    x = x_ref[...]                                        # (Cin, tile_hw)
    h = jnp.dot(w1_ref[...], x,
                preferred_element_type=jnp.float32) + b1_ref[...]
    h = leaky_relu(h)
    h = jnp.dot(w2_ref[...], h,
                preferred_element_type=jnp.float32) + b2_ref[...]
    h = leaky_relu(h)
    h = jnp.dot(w3_ref[...], h,
                preferred_element_type=jnp.float32) + b3_ref[...]
    h = leaky_relu(h)
    o_ref[...] = h.astype(o_ref.dtype)                    # (Cout, tile_hw)


def pointwise_net(x_nchw, params, *, tile_hw=512):
    """Forward pass of PointwiseNet.

    x_nchw : (N, Cin, H, W) float32
    params : dict with w1 (Cout,Cin), b1 (Cout,1), w2 (Cout,Cout), b2 (Cout,1),
             w3 (Cout,Cout), b3 (Cout,1)
    returns (N, Cout, H, W) float32
    """
    N, Cin, H, W = x_nchw.shape
    Cout = params["w1"].shape[0]
    HW = H * W

    # Free reshape: NCHW -> (N, Cin, H*W). No HBM transposes anywhere.
    x_rows = x_nchw.reshape(N, Cin, HW)

    # Pick a lane-aligned spatial tile; fall back to the full spatial extent
    # (which always satisfies the layout rules) for odd shapes.
    if HW % 128 == 0:
        tile_hw = max(128, min((tile_hw // 128) * 128, HW))
    else:
        tile_hw = HW
    grid = (N, pl.cdiv(HW, tile_hw))

    out_rows = pl.pallas_call(
        pointwise_kernel,
        out_shape=jax.ShapeDtypeStruct((N, Cout, HW), jnp.float32),
        grid_spec=pltpu.PrefetchScalarGridSpec(
            num_scalar_prefetch=0,
            grid=grid,
            in_specs=[
                # activations: one batch element, full channels, spatial tile
                pl.BlockSpec((pl.Squeezed(), Cin, tile_hw),
                             lambda n, t: (n, 0, t)),
                # weights / biases: full arrays, same block for every tile
                pl.BlockSpec((Cout, Cin), lambda n, t: (0, 0)),
                pl.BlockSpec((Cout, 1), lambda n, t: (0, 0)),
                pl.BlockSpec((Cout, Cout), lambda n, t: (0, 0)),
                pl.BlockSpec((Cout, 1), lambda n, t: (0, 0)),
                pl.BlockSpec((Cout, Cout), lambda n, t: (0, 0)),
                pl.BlockSpec((Cout, 1), lambda n, t: (0, 0)),
            ],
            out_specs=pl.BlockSpec((pl.Squeezed(), Cout, tile_hw),
                                   lambda n, t: (n, 0, t)),
        ),
        compiler_params=pltpu.CompilerParams(
            dimension_semantics=("parallel", "parallel")),
    )(x_rows, params["w1"], params["b1"], params["w2"], params["b2"],
      params["w3"], params["b3"])

    # Free reshape back: (N, Cout, H*W) -> NCHW.
    return out_rows.reshape(N, Cout, H, W)


def init_params(key, in_channel, out_channel):
    """Deterministic synthetic init mimicking Conv2d(k=1) parameter shapes.

    PyTorch Conv2d weight is (Cout, Cin, 1, 1); we store it squeezed as
    (Cout, Cin) -- already the channel-first matmul form the kernel wants.
    Biases are (Cout, 1) for lane broadcast.
    """
    ks = jax.random.split(key, 6)

    def uinit(k, shape, fan_in):
        bound = 1.0 / jnp.sqrt(fan_in)
        return jax.random.uniform(k, shape, jnp.float32, -bound, bound)

    return {
        "w1": uinit(ks[0], (out_channel, in_channel), in_channel),
        "b1": uinit(ks[1], (out_channel, 1), in_channel),
        "w2": uinit(ks[2], (out_channel, out_channel), out_channel),
        "b2": uinit(ks[3], (out_channel, 1), out_channel),
        "w3": uinit(ks[4], (out_channel, out_channel), out_channel),
        "b3": uinit(ks[5], (out_channel, 1), out_channel),
    }


def reference_forward(x_nchw, params):
    """Pure-JAX reference matching the PyTorch module semantics."""
    def leaky(v):
        return jnp.where(v > 0, v, 0.01 * v)
    h = jnp.einsum("oc,nchw->nohw", params["w1"], x_nchw) \
        + params["b1"].reshape(1, -1, 1, 1)
    h = leaky(h)
    h = jnp.einsum("oc,nchw->nohw", params["w2"], h) \
        + params["b2"].reshape(1, -1, 1, 1)
    h = leaky(h)
    h = jnp.einsum("oc,nchw->nohw", params["w3"], h) \
        + params["b3"].reshape(1, -1, 1, 1)
    h = leaky(h)
    return h


if __name__ == "__main__":
    key = jax.random.PRNGKey(0)
    k_x, k_p = jax.random.split(key)

    N, Cin, H, W = 2, 4, 16, 16
    Cout = 8

    x = jax.random.normal(k_x, (N, Cin, H, W), jnp.float32)
    params = init_params(k_p, Cin, Cout)

    out = pointwise_net(x, params)
    out = jax.block_until_ready(out)

    ref = reference_forward(x, params)
    assert out.shape == (N, Cout, H, W)
    assert jnp.allclose(out, ref, atol=1e-5, rtol=1e-5), "mismatch vs reference"

    print("KERNEL_OK")
</pallas_src>

<mosaic_0001>
module attributes {stable_mosaic.version = 11 : i64} {
  func.func @pointwise_kernel(%arg0: i32, %arg1: i32, %arg2: memref<1x4x256xf32, #tpu.memory_space<vmem>>, %arg3: memref<8x4xf32, #tpu.memory_space<vmem>>, %arg4: memref<8x1xf32, #tpu.memory_space<vmem>>, %arg5: memref<8x8xf32, #tpu.memory_space<vmem>>, %arg6: memref<8x1xf32, #tpu.memory_space<vmem>>, %arg7: memref<8x8xf32, #tpu.memory_space<vmem>>, %arg8: memref<8x1xf32, #tpu.memory_space<vmem>>, %arg9: memref<1x8x256xf32, #tpu.memory_space<vmem>>) attributes {dimension_semantics = [#tpu.dimension_semantics<parallel>, #tpu.dimension_semantics<parallel>], iteration_bounds = array<i64: 2, 1>, scalar_prefetch = 0 : i64, scratch_operands = 0 : i64, tpu.core_type = #tpu.core_type<tc>, window_params = [{transform_indices = @transform_0, window_bounds = array<i64: 1, 4, 256>}, {pipeline_mode = #tpu.pipeline_mode<synchronous>, transform_indices = @transform_1, window_bounds = array<i64: 8, 4>}, {pipeline_mode = #tpu.pipeline_mode<synchronous>, transform_indices = @transform_2, window_bounds = array<i64: 8, 1>}, {pipeline_mode = #tpu.pipeline_mode<synchronous>, transform_indices = @transform_3, window_bounds = array<i64: 8, 8>}, {pipeline_mode = #tpu.pipeline_mode<synchronous>, transform_indices = @transform_4, window_bounds = array<i64: 8, 1>}, {pipeline_mode = #tpu.pipeline_mode<synchronous>, transform_indices = @transform_5, window_bounds = array<i64: 8, 8>}, {pipeline_mode = #tpu.pipeline_mode<synchronous>, transform_indices = @transform_6, window_bounds = array<i64: 8, 1>}, {transform_indices = @transform_7, window_bounds = array<i64: 1, 8, 256>}]} {
    %c0 = arith.constant 0 : index
    %c0_0 = arith.constant 0 : index
    %c0_1 = arith.constant 0 : index
    %0 = vector.load %arg2[%c0, %c0_0, %c0_1] : memref<1x4x256xf32, #tpu.memory_space<vmem>>, vector<1x4x256xf32>
    %1 = vector.shape_cast %0 : vector<1x4x256xf32> to vector<4x256xf32>
    %c0_2 = arith.constant 0 : index
    %c0_3 = arith.constant 0 : index
    %2 = vector.load %arg3[%c0_2, %c0_3] : memref<8x4xf32, #tpu.memory_space<vmem>>, vector<8x4xf32>
    %cst = arith.constant dense<0.000000e+00> : vector<8x256xf32>
    %3 = tpu.matmul %2, %1, %cst {dimension_numbers = #tpu.dot_dimension_numbers<[1], [0], [0], [1], [0, 0, 1, 1], [], []>} : vector<8x4xf32>, vector<4x256xf32>, vector<8x256xf32> -> vector<8x256xf32>
    %c0_4 = arith.constant 0 : index
    %c0_5 = arith.constant 0 : index
    %4 = vector.load %arg4[%c0_4, %c0_5] : memref<8x1xf32, #tpu.memory_space<vmem>>, vector<8x1xf32>
    %5 = vector.broadcast %4 : vector<8x1xf32> to vector<8x256xf32>
    %6 = arith.addf %3, %5 : vector<8x256xf32>
    %cst_6 = arith.constant 0.000000e+00 : f32
    %7 = vector.broadcast %cst_6 : f32 to vector<8x256xf32>
    %8 = arith.cmpf ogt, %6, %7 : vector<8x256xf32>
    %cst_7 = arith.constant 0.00999999977 : f32
    %9 = vector.broadcast %cst_7 : f32 to vector<8x256xf32>
    %10 = arith.mulf %9, %6 : vector<8x256xf32>
    %11 = arith.select %8, %6, %10 : vector<8x256xi1>, vector<8x256xf32>
    %c0_8 = arith.constant 0 : index
    %c0_9 = arith.constant 0 : index
    %12 = vector.load %arg5[%c0_8, %c0_9] : memref<8x8xf32, #tpu.memory_space<vmem>>, vector<8x8xf32>
    %cst_10 = arith.constant dense<0.000000e+00> : vector<8x256xf32>
    %13 = tpu.matmul %12, %11, %cst_10 {dimension_numbers = #tpu.dot_dimension_numbers<[1], [0], [0], [1], [0, 0, 1, 1], [], []>} : vector<8x8xf32>, vector<8x256xf32>, vector<8x256xf32> -> vector<8x256xf32>
    %c0_11 = arith.constant 0 : index
    %c0_12 = arith.constant 0 : index
    %14 = vector.load %arg6[%c0_11, %c0_12] : memref<8x1xf32, #tpu.memory_space<vmem>>, vector<8x1xf32>
    %15 = vector.broadcast %14 : vector<8x1xf32> to vector<8x256xf32>
    %16 = arith.addf %13, %15 : vector<8x256xf32>
    %cst_13 = arith.constant 0.000000e+00 : f32
    %17 = vector.broadcast %cst_13 : f32 to vector<8x256xf32>
    %18 = arith.cmpf ogt, %16, %17 : vector<8x256xf32>
    %cst_14 = arith.constant 0.00999999977 : f32
    %19 = vector.broadcast %cst_14 : f32 to vector<8x256xf32>
    %20 = arith.mulf %19, %16 : vector<8x256xf32>
    %21 = arith.select %18, %16, %20 : vector<8x256xi1>, vector<8x256xf32>
    %c0_15 = arith.constant 0 : index
    %c0_16 = arith.constant 0 : index
    %22 = vector.load %arg7[%c0_15, %c0_16] : memref<8x8xf32, #tpu.memory_space<vmem>>, vector<8x8xf32>
    %cst_17 = arith.constant dense<0.000000e+00> : vector<8x256xf32>
    %23 = tpu.matmul %22, %21, %cst_17 {dimension_numbers = #tpu.dot_dimension_numbers<[1], [0], [0], [1], [0, 0, 1, 1], [], []>} : vector<8x8xf32>, vector<8x256xf32>, vector<8x256xf32> -> vector<8x256xf32>
    %c0_18 = arith.constant 0 : index
    %c0_19 = arith.constant 0 : index
    %24 = vector.load %arg8[%c0_18, %c0_19] : memref<8x1xf32, #tpu.memory_space<vmem>>, vector<8x1xf32>
    %25 = vector.broadcast %24 : vector<8x1xf32> to vector<8x256xf32>
    %26 = arith.addf %23, %25 : vector<8x256xf32>
    %cst_20 = arith.constant 0.000000e+00 : f32
    %27 = vector.broadcast %cst_20 : f32 to vector<8x256xf32>
    %28 = arith.cmpf ogt, %26, %27 : vector<8x256xf32>
    %cst_21 = arith.constant 0.00999999977 : f32
    %29 = vector.broadcast %cst_21 : f32 to vector<8x256xf32>
    %30 = arith.mulf %29, %26 : vector<8x256xf32>
    %31 = arith.select %28, %26, %30 : vector<8x256xi1>, vector<8x256xf32>
    %c0_22 = arith.constant 0 : index
    %c0_23 = arith.constant 0 : index
    %c0_24 = arith.constant 0 : index
    %32 = vector.load %arg9[%c0_22, %c0_23, %c0_24] : memref<1x8x256xf32, #tpu.memory_space<vmem>>, vector<1x8x256xf32>
    %33 = vector.shape_cast %32 : vector<1x8x256xf32> to vector<8x256xf32>
    %34 = vector.shape_cast %31 : vector<8x256xf32> to vector<1x8x256xf32>
    tpu.vector_store %arg9[%c0_22, %c0_23, %c0_24], %34 {strides = array<i32>} : memref<1x8x256xf32, #tpu.memory_space<vmem>>, vector<1x8x256xf32>,
    return
  }
  func.func @transform_0(%arg0: i32, %arg1: i32) -> (i32, i32, i32) {
    %c0_i32 = arith.constant 0 : i32
    %c0_i32_0 = arith.constant 0 : i32
    return %arg0, %c0_i32, %arg1 : i32, i32, i32
  }
  func.func @transform_1(%arg0: i32, %arg1: i32) -> (i32, i32) {
    %c0_i32 = arith.constant 0 : i32
    %c0_i32_0 = arith.constant 0 : i32
    %c0_i32_1 = arith.constant 0 : i32
    return %c0_i32, %c0_i32_0 : i32, i32
  }
  func.func @transform_2(%arg0: i32, %arg1: i32) -> (i32, i32) {
    %c0_i32 = arith.constant 0 : i32
    %c0_i32_0 = arith.constant 0 : i32
    %c0_i32_1 = arith.constant 0 : i32
    return %c0_i32, %c0_i32_0 : i32, i32
  }
  func.func @transform_3(%arg0: i32, %arg1: i32) -> (i32, i32) {
    %c0_i32 = arith.constant 0 : i32
    %c0_i32_0 = arith.constant 0 : i32
    %c0_i32_1 = arith.constant 0 : i32
    return %c0_i32, %c0_i32_0 : i32, i32
  }
  func.func @transform_4(%arg0: i32, %arg1: i32) -> (i32, i32) {
    %c0_i32 = arith.constant 0 : i32
    %c0_i32_0 = arith.constant 0 : i32
    %c0_i32_1 = arith.constant 0 : i32
    return %c0_i32, %c0_i32_0 : i32, i32
  }
  func.func @transform_5(%arg0: i32, %arg1: i32) -> (i32, i32) {
    %c0_i32 = arith.constant 0 : i32
    %c0_i32_0 = arith.constant 0 : i32
    %c0_i32_1 = arith.constant 0 : i32
    return %c0_i32, %c0_i32_0 : i32, i32
  }
  func.func @transform_6(%arg0: i32, %arg1: i32) -> (i32, i32) {
    %c0_i32 = arith.constant 0 : i32
    %c0_i32_0 = arith.constant 0 : i32
    %c0_i32_1 = arith.constant 0 : i32
    return %c0_i32, %c0_i32_0 : i32, i32
  }
  func.func @transform_7(%arg0: i32, %arg1: i32) -> (i32, i32, i32) {
    %c0_i32 = arith.constant 0 : i32
    %c0_i32_0 = arith.constant 0 : i32
    return %arg0, %c0_i32, %arg1 : i32, i32, i32
  }
}

</mosaic_0001>

<llo_original>
// kernel: tpu_custom_call.1
$region0: #{tpu_custom_call.1}
  #allocation0 [shape = 'u32[]', space=smem, size = 0x4, offset = 0x4, fixed_abs, tag = 'smem constant byte address 0x4 - core index']
  #allocation1 [shape = 'u32[72,128]{1,0:T(1,128)}', space=vmem, size = 0x9000, scoped, tag = 'internal scratch']
  %s0 = inlined_call_operand.vmem [shape: f32[2,4,256], index: 0, kind: input, shape index: {}]
  %s1 = inlined_call_operand.vmem [shape: f32[8,4], index: 1, kind: input, shape index: {}]
  %s2 = inlined_call_operand.vmem [shape: f32[8,1], index: 2, kind: input, shape index: {}]
  %s3 = inlined_call_operand.vmem [shape: f32[8,8], index: 3, kind: input, shape index: {}]
  %s4 = inlined_call_operand.vmem [shape: f32[8,1], index: 4, kind: input, shape index: {}]
  %s5 = inlined_call_operand.vmem [shape: f32[8,8], index: 5, kind: input, shape index: {}]
  %s6 = inlined_call_operand.vmem [shape: f32[8,1], index: 6, kind: input, shape index: {}]
  %s7 = inlined_call_operand.hbm [shape: f32[2,8,256], index: 7, kind: output, shape index: {}]
  %s8 = sld [smem:[#allocation0]]
  $region61: #{tpu_custom_call.1} parent=0
    _
  %s10 = ssub.s32 1, %s8
  %s11 = scalar_select 0, %s10, %s8
  $region1: #{tpu_custom_call.1} parent=0
    #allocation2 [shape = 'u8[16384]{0}', space=vmem, size = 0x4000, scoped, tag = 'output window, operand 0']
    #allocation3 [shape = 's32[2]{0}', space=sflag, size = 0x8, scoped, tag = 'scoped memory for tpu_custom_call.1']
    %12 = vsyncpa [#allocation3], 0
    %s13 = scalar_lea.sflag [#allocation3], 1
    %14 = vsyncpa %s13, 0
    loop: start=0, step=1, limit=4
    $region2: #{tpu_custom_call.1} parent=1 // loop_pre_header
      _
    $region3: #{tpu_custom_call.1} parent=1 // loop_header
      %s16 = sphi 0, %s20
      %p17 = scmp.ge.s32.totalorder %s16, 4
      %s23 = sphi 0, %s35
      %s24 = sphi 0, %s31
      %s25 = sphi 0, %s23
      %s26 = sphi 0, %s24
      %s27 = sphi 0, %s25
      %s28 = sphi 0, %s26
      %s40 = sphi 0, %s42
      %s43 = sphi 0, %s40
      %s44 = sphi 0, %s43
      %s60 = sphi 0, %s44
      %s64 = sphi 0, %s64
      %s66 = sphi 0, %s64
      %s67 = sphi 0, %s66
      %s81 = sphi 0, %s67
      %s85 = sphi 0, %s85
      %s87 = sphi 0, %s85
      %s88 = sphi 0, %s87
      %s102 = sphi 0, %s88
      %s106 = sphi 0, %s106
      %s108 = sphi 0, %s106
      %s109 = sphi 0, %s108
      %s123 = sphi 0, %s109
      %s127 = sphi 0, %s127
      %s129 = sphi 0, %s127
      %s130 = sphi 0, %s129
      %s144 = sphi 0, %s130
      %s148 = sphi 0, %s148
      %s150 = sphi 0, %s148
      %s151 = sphi 0, %s150
      %s165 = sphi 0, %s151
      %s169 = sphi 0, %s169
      %s171 = sphi 0, %s169
      %s172 = sphi 0, %s171
      %s186 = sphi 0, %s172
      %s194 = sphi 0, %s196
      %s197 = sphi 0, %s194
      %s198 = sphi 0, %s197
      %s214 = sphi 0, %s198
    $region4: #{tpu_custom_call.1} parent=1 // loop_header_branch
      %19 = sbr.rel (%p17) target = $region8
    $region5: #{tpu_custom_call.1} parent=1 // loop_body
      %s21 = ssub.s32 %s16, 1
      %s22 = ssub.s32 %s16, 2
      %s29 = sadd.s32 1, %s24
      %p30 = scmp.ge.s32.totalorder %s29, 1
      %s31 = scalar_select %p30, 0, %s29
      %s32 = sadd.s32 1, %s23
      %s33 = scalar_select %p30, %s32, %s23
      %p34 = scmp.ge.s32.totalorder %s33, 2
      %s35 = scalar_select %p34, 0, %s33
      %s36 = ssub.s32 %s23, %s35
      %s37 = ssub.s32 %s24, %s31
      %s38 = sor.u32 %s36, %s37
      %p39 = scmp.eq.s32.totalorder %s38, 0
      %s41 = sadd.s32 %s40, 1
      %s42 = scalar_select %p39, %s40, %s41
      %p45 = pneg %p39
      %p46 = scmp.eq.s32.totalorder %s16, 1
      %p47 = por %p45, %p46
      %p48 = scmp.ne.s32.totalorder %s40, %s43
      %p49 = scmp.eq.s32.totalorder %s16, 0
      %p50 = por %p48, %p49
      %p51 = scmp.ne.s32.totalorder %s40, %s43
      %p52 = scmp.eq.s32.totalorder %s21, 1
      %p53 = por %p51, %p52
      %p54 = scmp.ne.s32.totalorder %s43, %s44
      %p55 = scmp.eq.s32.totalorder %s21, 0
      %p56 = por %p54, %p55
      %p57 = scmp.ne.s32.totalorder %s43, %s44
      %p58 = scmp.eq.s32.totalorder %s22, 1
      %p59 = por %p57, %p58
      %p61 = scmp.ne.s32.totalorder %s44, %s60
      %p62 = scmp.eq.s32.totalorder %s22, 0
      %p63 = por %p61, %p62
      %s65 = sadd.s32 %s64, 1
      %p68 = scmp.eq.s32.totalorder %s16, 1
      %p69 = scmp.ne.s32.totalorder %s64, %s66
      %p70 = scmp.eq.s32.totalorder %s16, 0
      %p71 = por %p69, %p70
      %p72 = scmp.ne.s32.totalorder %s64, %s66
      %p73 = scmp.eq.s32.totalorder %s21, 1
      %p74 = por %p72, %p73
      %p75 = scmp.ne.s32.totalorder %s66, %s67
      %p76 = scmp.eq.s32.totalorder %s21, 0
      %p77 = por %p75, %p76
      %p78 = scmp.ne.s32.totalorder %s66, %s67
      %p79 = scmp.eq.s32.totalorder %s22, 1
      %p80 = por %p78, %p79
      %p82 = scmp.ne.s32.totalorder %s67, %s81
      %p83 = scmp.eq.s32.totalorder %s22, 0
      %p84 = por %p82, %p83
      %s86 = sadd.s32 %s85, 1
      %p89 = scmp.eq.s32.totalorder %s16, 1
      %p90 = scmp.ne.s32.totalorder %s85, %s87
      %p91 = scmp.eq.s32.totalorder %s16, 0
      %p92 = por %p90, %p91
      %p93 = scmp.ne.s32.totalorder %s85, %s87
      %p94 = scmp.eq.s32.totalorder %s21, 1
      %p95 = por %p93, %p94
      %p96 = scmp.ne.s32.totalorder %s87, %s88
      %p97 = scmp.eq.s32.totalorder %s21, 0
      %p98 = por %p96, %p97
      %p99 = scmp.ne.s32.totalorder %s87, %s88
      %p100 = scmp.eq.s32.totalorder %s22, 1
      %p101 = por %p99, %p100
      %p103 = scmp.ne.s32.totalorder %s88, %s102
      %p104 = scmp.eq.s32.totalorder %s22, 0
      %p105 = por %p103, %p104
      %s107 = sadd.s32 %s106, 1
      %p110 = scmp.eq.s32.totalorder %s16, 1
      %p111 = scmp.ne.s32.totalorder %s106, %s108
      %p112 = scmp.eq.s32.totalorder %s16, 0
      %p113 = por %p111, %p112
      %p114 = scmp.ne.s32.totalorder %s106, %s108
      %p115 = scmp.eq.s32.totalorder %s21, 1
      %p116 = por %p114, %p115
      %p117 = scmp.ne.s32.totalorder %s108, %s109
      %p118 = scmp.eq.s32.totalorder %s21, 0
      %p119 = por %p117, %p118
      %p120 = scmp.ne.s32.totalorder %s108, %s109
      %p121 = scmp.eq.s32.totalorder %s22, 1
      %p122 = por %p120, %p121
      %p124 = scmp.ne.s32.totalorder %s109, %s123
      %p125 = scmp.eq.s32.totalorder %s22, 0
      %p126 = por %p124, %p125
      %s128 = sadd.s32 %s127, 1
      %p131 = scmp.eq.s32.totalorder %s16, 1
      %p132 = scmp.ne.s32.totalorder %s127, %s129
      %p133 = scmp.eq.s32.totalorder %s16, 0
      %p134 = por %p132, %p133
      %p135 = scmp.ne.s32.totalorder %s127, %s129
      %p136 = scmp.eq.s32.totalorder %s21, 1
      %p137 = por %p135, %p136
      %p138 = scmp.ne.s32.totalorder %s129, %s130
      %p139 = scmp.eq.s32.totalorder %s21, 0
      %p140 = por %p138, %p139
      %p141 = scmp.ne.s32.totalorder %s129, %s130
      %p142 = scmp.eq.s32.totalorder %s22, 1
      %p143 = por %p141, %p142
      %p145 = scmp.ne.s32.totalorder %s130, %s144
      %p146 = scmp.eq.s32.totalorder %s22, 0
      %p147 = por %p145, %p146
      %s149 = sadd.s32 %s148, 1
      %p152 = scmp.eq.s32.totalorder %s16, 1
      %p153 = scmp.ne.s32.totalorder %s148, %s150
      %p154 = scmp.eq.s32.totalorder %s16, 0
      %p155 = por %p153, %p154
      %p156 = scmp.ne.s32.totalorder %s148, %s150
      %p157 = scmp.eq.s32.totalorder %s21, 1
      %p158 = por %p156, %p157
      %p159 = scmp.ne.s32.totalorder %s150, %s151
      %p160 = scmp.eq.s32.totalorder %s21, 0
      %p161 = por %p159, %p160
      %p162 = scmp.ne.s32.totalorder %s150, %s151
      %p163 = scmp.eq.s32.totalorder %s22, 1
      %p164 = por %p162, %p163
      %p166 = scmp.ne.s32.totalorder %s151, %s165
      %p167 = scmp.eq.s32.totalorder %s22, 0
      %p168 = por %p166, %p167
      %s170 = sadd.s32 %s169, 1
      %p173 = scmp.eq.s32.totalorder %s16, 1
      %p174 = scmp.ne.s32.totalorder %s169, %s171
      %p175 = scmp.eq.s32.totalorder %s16, 0
      %p176 = por %p174, %p175
      %p177 = scmp.ne.s32.totalorder %s169, %s171
      %p178 = scmp.eq.s32.totalorder %s21, 1
      %p179 = por %p177, %p178
      %p180 = scmp.ne.s32.totalorder %s171, %s172
      %p181 = scmp.eq.s32.totalorder %s21, 0
      %p182 = por %p180, %p181
      %p183 = scmp.ne.s32.totalorder %s171, %s172
      %p184 = scmp.eq.s32.totalorder %s22, 1
      %p185 = por %p183, %p184
      %p187 = scmp.ne.s32.totalorder %s172, %s186
      %p188 = scmp.eq.s32.totalorder %s22, 0
      %p189 = por %p187, %p188
      %s190 = ssub.s32 %s23, %s35
      %s191 = ssub.s32 %s24, %s31
      %s192 = sor.u32 %s190, %s191
      %p193 = scmp.eq.s32.totalorder %s192, 0
      %s195 = sadd.s32 %s194, 1
      %s196 = scalar_select %p193, %s194, %s195
      %p199 = pneg %p193
      %p200 = scmp.eq.s32.totalorder %s16, 1
      %p201 = por %p199, %p200
      %p202 = scmp.ne.s32.totalorder %s194, %s197
      %p203 = scmp.eq.s32.totalorder %s16, 0
      %p204 = por %p202, %p203
      %p205 = scmp.ne.s32.totalorder %s194, %s197
      %p206 = scmp.eq.s32.totalorder %s21, 1
      %p207 = por %p205, %p206
      %p208 = scmp.ne.s32.totalorder %s197, %s198
      %p209 = scmp.eq.s32.totalorder %s21, 0
      %p210 = por %p208, %p209
      %p211 = scmp.ne.s32.totalorder %s197, %s198
      %p212 = scmp.eq.s32.totalorder %s22, 1
      %p213 = por %p211, %p212
      %p215 = scmp.ne.s32.totalorder %s198, %s214
      %p216 = scmp.eq.s32.totalorder %s22, 0
      %p217 = por %p215, %p216
      %p218 = scmp.le.s32.totalorder 1, %s16
      %p219 = scmp.lt.s32.totalorder %s16, 3
      %p220 = pnand %p218, %p219
      %p221 = pneg %p220
      // Predicated region
      $region9: #{tpu_custom_call.1} parent=5 // pred_check
        _
      $region10: #{tpu_custom_call.1} parent=5 // pred_check_branch
        %223 = sbr.rel (%p220) target = $region12
      $region11: #{tpu_custom_call.1} parent=5 // pred_region
        %s224 = ssub.s32 %s16, 1
        // Predicated region
        $region13: #{tpu_custom_call.1} parent=11 // pred_check
          %p225 = pneg %p77
        $region14: #{tpu_custom_call.1} parent=11 // pred_check_branch
          %227 = sbr.rel (%p225) target = $region16
        $region15: #{tpu_custom_call.1} parent=11 // pred_region
          _
        $region16: #{tpu_custom_call.1} parent=11 // pred_fallthru
          _
        // Predicated region
        $region17: #{tpu_custom_call.1} parent=11 // pred_check
          %p228 = pneg %p98
        $region18: #{tpu_custom_call.1} parent=11 // pred_check_branch
          %230 = sbr.rel (%p228) target = $region20
        $region19: #{tpu_custom_call.1} parent=11 // pred_region
          _
        $region20: #{tpu_custom_call.1} parent=11 // pred_fallthru
          _
        // Predicated region
        $region21: #{tpu_custom_call.1} parent=11 // pred_check
          %p231 = pneg %p119
        $region22: #{tpu_custom_call.1} parent=11 // pred_check_branch
          %233 = sbr.rel (%p231) target = $region24
        $region23: #{tpu_custom_call.1} parent=11 // pred_region
          _
        $region24: #{tpu_custom_call.1} parent=11 // pred_fallthru
          _
        // Predicated region
        $region25: #{tpu_custom_call.1} parent=11 // pred_check
          %p234 = pneg %p140
        $region26: #{tpu_custom_call.1} parent=11 // pred_check_branch
          %236 = sbr.rel (%p234) target = $region28
        $region27: #{tpu_custom_call.1} parent=11 // pred_region
          _
        $region28: #{tpu_custom_call.1} parent=11 // pred_fallthru
          _
        // Predicated region
        $region29: #{tpu_custom_call.1} parent=11 // pred_check
          %p237 = pneg %p161
        $region30: #{tpu_custom_call.1} parent=11 // pred_check_branch
          %239 = sbr.rel (%p237) target = $region32
        $region31: #{tpu_custom_call.1} parent=11 // pred_region
          _
        $region32: #{tpu_custom_call.1} parent=11 // pred_fallthru
          _
        // Predicated region
        $region33: #{tpu_custom_call.1} parent=11 // pred_check
          %p240 = pneg %p182
        $region34: #{tpu_custom_call.1} parent=11 // pred_check_branch
          %242 = sbr.rel (%p240) target = $region36
        $region35: #{tpu_custom_call.1} parent=11 // pred_region
          _
        $region36: #{tpu_custom_call.1} parent=11 // pred_fallthru
          _
      $region12: #{tpu_custom_call.1} parent=5 // pred_fallthru
        _
      %p243 = scmp.lt.s32.totalorder %s16, 2
      // Predicated region
      $region37: #{tpu_custom_call.1} parent=5 // pred_check
        %p244 = pneg %p243
      $region38: #{tpu_custom_call.1} parent=5 // pred_check_branch
        %246 = sbr.rel (%p244) target = $region40
      $region39: #{tpu_custom_call.1} parent=5 // pred_region
        // Predicated region
        $region41: #{tpu_custom_call.1} parent=39 // pred_check
          %p247 = pneg %p50
        $region42: #{tpu_custom_call.1} parent=39 // pred_check_branch
          %249 = sbr.rel (%p247) target = $region44
        $region43: #{tpu_custom_call.1} parent=39 // pred_region
          %s250 = smul.u32 2, %s24
          %p251 = scmp.lt.s32.totalorder %s23, 1
          %s252 = scalar_select %p251, %s23, 1
          %p253 = scmp.lt.s32.totalorder %s250, 1
          %s254 = scalar_select %p253, %s250, 1
          %s255 = smul.addr %s252, 2
          %s256 = sadd.s32 %s254, %s255
          %s257 = smul.addr %s256, 4
          %s258 = scalar_lea.vmem %s0, %s257
          %s259 = smul.u32 2, %s24
        $region44: #{tpu_custom_call.1} parent=39 // pred_fallthru
          _
      $region40: #{tpu_custom_call.1} parent=5 // pred_fallthru
        _
      %p260 = scmp.le.s32.totalorder 1, %s16
      %p261 = scmp.lt.s32.totalorder %s16, 3
      %p262 = pnand %p260, %p261
      %p263 = pneg %p262
      // Predicated region
      $region45: #{tpu_custom_call.1} parent=5 // pred_check
        _
      $region46: #{tpu_custom_call.1} parent=5 // pred_check_branch
        %265 = sbr.rel (%p262) target = $region48
      $region47: #{tpu_custom_call.1} parent=5 // pred_region
        %s266 = ssub.s32 %s16, 1
        %s267 = smul.u32 2, %s26
        %p268 = scmp.lt.s32.totalorder %s25, 1
        %s269 = scalar_select %p268, %s25, 1
        %p270 = scmp.lt.s32.totalorder %s267, 1
        %s271 = scalar_select %p270, %s267, 1
        %s272 = smul.addr %s269, 2
        %s273 = sadd.s32 %s271, %s272
        %s274 = smul.addr %s273, 4
        %s275 = scalar_lea.vmem %s0, %s274
        %p276 = pneg %p56
        %p277 = pneg %p53
        %p278 = pneg %p77
        %p279 = pneg %p74
        %p280 = pneg %p98
        %p281 = pneg %p95
        %p282 = pneg %p119
        %p283 = pneg %p116
        %p284 = pneg %p140
        %p285 = pneg %p137
        %p286 = pneg %p161
        %p287 = pneg %p158
        %p288 = pneg %p182
        %p289 = pneg %p179
        %p290 = pneg %p210
        %p291 = pneg %p207
        %s292 = sand.u32 %s197, 1
        %s293 = scalar_lea.sflag [#allocation3], %s292
        %s294 = sand.u32 %s197, 1
        %s295 = smul.addr %s294, 16
        %s296 = scalar_lea.vmem [#allocation2], %s295
        %s297 = smul.u32 2, %s26
        %p298 = scmp.lt.s32.totalorder %s25, 1
        %s299 = scalar_select %p298, %s25, 1
        %p300 = scmp.lt.s32.totalorder %s297, 1
        %s301 = scalar_select %p300, %s297, 1
        %s302 = smul.addr %s299, 2
        %s303 = sadd.s32 %s301, %s302
        %s304 = smul.addr %s303, 4
        %s305 = scalar_lea.vmem %s0, %s304
        %s306 = smul.u32 2, %s26
        %s307 = smul.u32 2, %s26
        %v308 = vld [vmem:[%s305] sm:$0xff]
        %v309 = vld [vmem:[%s1] sm:$0xff]
        %v310 = vld [vmem:[%s2] sm:$0xff]
        %312 = vset.pattern.permute.xlu0 0
        %313 = vperm.xlu0 %312, %v310
        %v314 = vpop.permute.xlu0 %313
        %317 = vst [vmem:[#allocation1] ss:$2 sm:$0xff] %v308
        %v318 = vld.sshfl [vmem:[#allocation1] sm:$0xff pattern:$0x75316420]
        %v319 = vld.sshfl [vmem:[#allocation1 + $0x8] sm:$0xff pattern:$0x75316420]
        %vm320 = vcmask 31744
        %v322 = vsel %vm320, %v309, 0
        %vm324 = vcmask 1043456
        %v325 = vsel %vm324, %v318, 0
        %v327 = vsel %vm324, %v319, 0
        %329 = vmatpush.msra.mxu0 0.0
        %330 = vmatpush.msra.mxu0 0.0
        %331 = vmatpush.msra.mxu0 0.0
        %332 = vmatpush.msra.mxu0 0.0
        %333 = vmatpush.msra.mxu0 0.0
        %334 = vmatpush.msra.mxu0 0.0
        %335 = vmatpush.msra.mxu0 0.0
        %336 = vmatpush.msra.mxu0 0.0
        %337 = vmatpush.msra.mxu0 0.0
        %338 = vmatpush.msra.mxu0 0.0
        %339 = vmatpush.msra.mxu0 0.0
        %340 = vmatpush.msra.mxu0 0.0
        %341 = vmatpush.msra.mxu0 0.0
        %342 = vmatpush.msra.mxu0 0.0
        %343 = vmatpush.msra.mxu0 0.0
        %344 = vmatpush.msra.mxu0 %v325
        %345 = vmatmul.f32.gmra.mxu0 %v322
        %v346 = vpop.f32.mrf.mxu0
        %v347 = vadd.f32 %v314, %v346
        %348 = vdwg.mxu0
        %349 = vmatpush.msra.mxu0 0.0
        %350 = vmatpush.msra.mxu0 0.0
        %351 = vmatpush.msra.mxu0 0.0
        %352 = vmatpush.msra.mxu0 0.0
        %353 = vmatpush.msra.mxu0 0.0
        %354 = vmatpush.msra.mxu0 0.0
        %355 = vmatpush.msra.mxu0 0.0
        %356 = vmatpush.msra.mxu0 0.0
        %357 = vmatpush.msra.mxu0 0.0
        %358 = vmatpush.msra.mxu0 0.0
        %359 = vmatpush.msra.mxu0 0.0
        %360 = vmatpush.msra.mxu0 0.0
        %361 = vmatpush.msra.mxu0 0.0
        %362 = vmatpush.msra.mxu0 0.0
        %363 = vmatpush.msra.mxu0 0.0
        %364 = vmatpush.msra.mxu0 %v327
        %365 = vmatmul.f32.gmra.mxu0 %v322
        %v366 = vpop.f32.mrf.mxu0
        %v367 = vadd.f32 %v314, %v366
        %368 = vdwg.mxu0
        %vm369 = vcmp.gt.f32.partialorder %v347, 0.0
        %vm370 = vcmp.gt.f32.partialorder %v367, 0.0
        %v371 = vmul.f32 %v347, 0.01
        %v372 = vmul.f32 %v367, 0.01
        %v373 = vsel %vm369, %v347, %v371
        %v374 = vsel %vm370, %v367, %v372
        %v375 = vld [vmem:[%s3] sm:$0xff]
        %v376 = vld [vmem:[%s4] sm:$0xff]
        %378 = vset.pattern.permute.xlu0 0
        %379 = vperm.xlu0 %378, %v376
        %v380 = vpop.permute.xlu0 %379
        %vm382 = vcmask 64512
        %v384 = vsel %vm382, %v375, 0
        %386 = vmatpush.msra.mxu0 0.0
        %387 = vmatpush.msra.mxu0 0.0
        %388 = vmatpush.msra.mxu0 0.0
        %389 = vmatpush.msra.mxu0 0.0
        %390 = vmatpush.msra.mxu0 0.0
        %391 = vmatpush.msra.mxu0 0.0
        %392 = vmatpush.msra.mxu0 0.0
        %393 = vmatpush.msra.mxu0 0.0
        %394 = vmatpush.msra.mxu0 0.0
        %395 = vmatpush.msra.mxu0 0.0
        %396 = vmatpush.msra.mxu0 0.0
        %397 = vmatpush.msra.mxu0 0.0
        %398 = vmatpush.msra.mxu0 0.0
        %399 = vmatpush.msra.mxu0 0.0
        %400 = vmatpush.msra.mxu0 0.0
        %401 = vmatpush.msra.mxu0 %v373
        %402 = vmatmul.f32.gmra.mxu0 %v384
        %v403 = vpop.f32.mrf.mxu0
        %v404 = vadd.f32 %v380, %v403
        %405 = vdwg.mxu0
        %406 = vmatpush.msra.mxu0 0.0
        %407 = vmatpush.msra.mxu0 0.0
        %408 = vmatpush.msra.mxu0 0.0
        %409 = vmatpush.msra.mxu0 0.0
        %410 = vmatpush.msra.mxu0 0.0
        %411 = vmatpush.msra.mxu0 0.0
        %412 = vmatpush.msra.mxu0 0.0
        %413 = vmatpush.msra.mxu0 0.0
        %414 = vmatpush.msra.mxu0 0.0
        %415 = vmatpush.msra.mxu0 0.0
        %416 = vmatpush.msra.mxu0 0.0
        %417 = vmatpush.msra.mxu0 0.0
        %418 = vmatpush.msra.mxu0 0.0
        %419 = vmatpush.msra.mxu0 0.0
        %420 = vmatpush.msra.mxu0 0.0
        %421 = vmatpush.msra.mxu0 %v374
        %422 = vmatmul.f32.gmra.mxu0 %v384
        %v423 = vpop.f32.mrf.mxu0
        %v424 = vadd.f32 %v380, %v423
        %425 = vdwg.mxu0
        %vm426 = vcmp.gt.f32.partialorder %v404, 0.0
        %vm427 = vcmp.gt.f32.partialorder %v424, 0.0
        %v428 = vmul.f32 %v404, 0.01
        %v429 = vmul.f32 %v424, 0.01
        %v430 = vsel %vm426, %v404, %v428
        %v431 = vsel %vm427, %v424, %v429
        %v432 = vld [vmem:[%s5] sm:$0xff]
        %v433 = vld [vmem:[%s6] sm:$0xff]
        %435 = vset.pattern.permute.xlu0 0
        %436 = vperm.xlu0 %435, %v433
        %v437 = vpop.permute.xlu0 %436
        %v440 = vsel %vm382, %v432, 0
        %442 = vmatpush.msra.mxu0 0.0
        %443 = vmatpush.msra.mxu0 0.0
        %444 = vmatpush.msra.mxu0 0.0
        %445 = vmatpush.msra.mxu0 0.0
        %446 = vmatpush.msra.mxu0 0.0
        %447 = vmatpush.msra.mxu0 0.0
        %448 = vmatpush.msra.mxu0 0.0
        %449 = vmatpush.msra.mxu0 0.0
        %450 = vmatpush.msra.mxu0 0.0
        %451 = vmatpush.msra.mxu0 0.0
        %452 = vmatpush.msra.mxu0 0.0
        %453 = vmatpush.msra.mxu0 0.0
        %454 = vmatpush.msra.mxu0 0.0
        %455 = vmatpush.msra.mxu0 0.0
        %456 = vmatpush.msra.mxu0 0.0
        %457 = vmatpush.msra.mxu0 %v430
        %458 = vmatmul.f32.gmra.mxu0 %v440
        %v459 = vpop.f32.mrf.mxu0
        %v460 = vadd.f32 %v437, %v459
        %461 = vdwg.mxu0
        %462 = vmatpush.msra.mxu0 0.0
        %463 = vmatpush.msra.mxu0 0.0
        %464 = vmatpush.msra.mxu0 0.0
        %465 = vmatpush.msra.mxu0 0.0
        %466 = vmatpush.msra.mxu0 0.0
        %467 = vmatpush.msra.mxu0 0.0
        %468 = vmatpush.msra.mxu0 0.0
        %469 = vmatpush.msra.mxu0 0.0
        %470 = vmatpush.msra.mxu0 0.0
        %471 = vmatpush.msra.mxu0 0.0
        %472 = vmatpush.msra.mxu0 0.0
        %473 = vmatpush.msra.mxu0 0.0
        %474 = vmatpush.msra.mxu0 0.0
        %475 = vmatpush.msra.mxu0 0.0
        %476 = vmatpush.msra.mxu0 0.0
        %477 = vmatpush.msra.mxu0 %v431
        %478 = vmatmul.f32.gmra.mxu0 %v440
        %v479 = vpop.f32.mrf.mxu0
        %v480 = vadd.f32 %v437, %v479
        %481 = vdwg.mxu0
        %vm482 = vcmp.gt.f32.partialorder %v460, 0.0
        %vm483 = vcmp.gt.f32.partialorder %v480, 0.0
        %v484 = vmul.f32 %v460, 0.01
        %v485 = vmul.f32 %v480, 0.01
        %v486 = vsel %vm482, %v460, %v484
        %v487 = vsel %vm483, %v480, %v485
        %488 = vst [vmem:[%s296] sm:$0xff] %v486
        %489 = vst [vmem:[%s296 + $0x8] sm:$0xff] %v487
        %s490 = sand.u32 %s197, 1
        %s491 = scalar_lea.sflag [#allocation3], %s490
        %s492 = sand.u32 %s197, 1
        %s493 = smul.addr %s492, 16
        %s494 = scalar_lea.vmem [#allocation2], %s493
        // Predicated region
        $region49: #{tpu_custom_call.1} parent=47 // pred_check
          %p495 = pneg %p207
        $region50: #{tpu_custom_call.1} parent=47 // pred_check_branch
          %497 = sbr.rel (%p495) target = $region52
        $region51: #{tpu_custom_call.1} parent=47 // pred_region
          %s498 = smul.u32 2, %s26
          %500 = vsyncadd %s491, 0
          %s501 = smul.addr %s25, 2
          %s502 = sadd.s32 %s498, %s501
          %s503 = smul.addr %s502, 8
          %s504 = scalar_lea.hbm %s7, %s503
          %s506 = sshll.u32 %s494, 4
          %s507 = int_to_ptr.vmem [resolvable:$true] %s506
          %s508 = sshll.u32 %s504, 4
          %s509 = int_to_ptr.hbm [resolvable:$true] %s508
          %511 = dma.vmem_to_hbm [thread:$0]  %s507, 256, %s509, %s491
        $region52: #{tpu_custom_call.1} parent=47 // pred_fallthru
          _
      $region48: #{tpu_custom_call.1} parent=5 // pred_fallthru
        _
      %p512 = scmp.le.s32.totalorder 2, %s16
      // Predicated region
      $region53: #{tpu_custom_call.1} parent=5 // pred_check
        %p513 = pneg %p512
      $region54: #{tpu_custom_call.1} parent=5 // pred_check_branch
        %515 = sbr.rel (%p513) target = $region56
      $region55: #{tpu_custom_call.1} parent=5 // pred_region
        %s516 = ssub.s32 %s16, 2
        // Predicated region
        $region57: #{tpu_custom_call.1} parent=55 // pred_check
          %p517 = pneg %p213
        $region58: #{tpu_custom_call.1} parent=55 // pred_check_branch
          %519 = sbr.rel (%p517) target = $region60
        $region59: #{tpu_custom_call.1} parent=55 // pred_region
          %s520 = sand.u32 %s198, 1
          %s521 = scalar_lea.sflag [#allocation3], %s520
          %s522 = sand.u32 %s198, 1
          %s523 = smul.addr %s522, 16
          %s524 = scalar_lea.vmem [#allocation2], %s523
          %526 = dma.done %s521, 256
        $region60: #{tpu_custom_call.1} parent=55 // pred_fallthru
          _
      $region56: #{tpu_custom_call.1} parent=5 // pred_fallthru
        _
    $region6: #{tpu_custom_call.1} parent=1 // loop_footer
      %s20 = sadd.s32 1, %s16
    $region7: #{tpu_custom_call.1} parent=1 // loop_footer_branch
      %15 = sbr.rel target = $region3
    $region8: #{tpu_custom_call.1} parent=1 // loop_exit
      _
    %527 = vsyncpa [#allocation3], 1
    %s528 = scalar_lea.sflag [#allocation3], 1
    %529 = vsyncpa %s528, 1

</llo_original>
